<compile_context>
chip_gen: v7x
topology: tpu7x:2x2x1
jax: 0.10.0
libtpu: 0.0.40
codegen_flags: <defaults>
</compile_context>

<pallas_src>
import jax
import jax.numpy as jnp
from jax.experimental import pallas as pl
from jax.experimental.pallas import tpu as pltpu


def text_encoding_kernel(des_ref, sta_ref, wd_ref, ws_ref, bias_ref, out_ref):
    tb, sp1, h = out_ref.shape
    s = sp1 - 1

    # des branch: [TB, Dd] @ [Dd, H] -- single 2-D MXU matmul, f32 accumulate.
    des_out = jnp.dot(des_ref[...], wd_ref[...], preferred_element_type=jnp.float32)

    # sta branch (pre-flattened in the wrapper): [TB*S, Ds] @ [Ds, H] -- one
    # MXU matmul instead of a TB-way batched einsum.
    sta_out = jnp.dot(sta_ref[...], ws_ref[...], preferred_element_type=jnp.float32)
    sta_out = sta_out.reshape(tb, s, h)

    # Concatenate (des row 0, sta rows 1..S), add the fused (S+1, H) bias table
    # with a single broadcast, and write the tile with one unmasked full store.
    res = jnp.concatenate([des_out[:, None, :], sta_out], axis=1)
    res = res + bias_ref[...][None, :, :]
    out_ref[...] = res.astype(out_ref.dtype)


def text_encoding(des, sta, wd, bd, ws, bs, *, block_b=None, compute_dtype=None):
    """TextEncoding forward.

    des: [B, des_dim], sta: [B, S, sta_dim]
    wd/ws: nn.Linear weights [H, in_dim], bd/bs: biases [H]
    returns: [B, S+1, H] float32
    """
    B, des_dim = des.shape
    _, S, sta_dim = sta.shape
    H = wd.shape[0]

    # Optional bf16 inputs/weights for scaled-up shapes on v6e/v7x (f32 accum
    # is kept inside the kernel via preferred_element_type).
    if compute_dtype is not None:
        des, sta = des.astype(compute_dtype), sta.astype(compute_dtype)
        wd, ws = wd.astype(compute_dtype), ws.astype(compute_dtype)

    # Wrapper-side layout plumbing (free XLA ops, keeps the kernel lean):
    wd_t = wd.T                                   # (des_dim, H)
    ws_t = ws.T                                   # (sta_dim, H)
    sta_2d = sta.reshape(B * S, sta_dim)          # one 2-D matmul operand
    bias = jnp.concatenate(                       # fused per-row bias table
        [bd.reshape(1, H), jnp.broadcast_to(bs.reshape(1, H), (S, H))], axis=0
    ).astype(jnp.float32)                         # (S+1, H)

    if block_b is None:
        block_b = B if B <= 128 else 128          # 128-aligned batch tiles at scale
    grid = (pl.cdiv(B, block_b),)

    return pl.pallas_call(
        text_encoding_kernel,
        out_shape=jax.ShapeDtypeStruct((B, S + 1, H), jnp.float32),
        grid_spec=pltpu.PrefetchScalarGridSpec(
            num_scalar_prefetch=0,
            grid=grid,
            in_specs=[
                pl.BlockSpec((block_b, des_dim), lambda i: (i, 0)),
                pl.BlockSpec((block_b * S, sta_dim), lambda i: (i, 0)),
                pl.BlockSpec((des_dim, H), lambda i: (0, 0)),   # untiled weight
                pl.BlockSpec((sta_dim, H), lambda i: (0, 0)),   # untiled weight
                pl.BlockSpec((S + 1, H), lambda i: (0, 0)),     # untiled bias
            ],
            out_specs=pl.BlockSpec((block_b, S + 1, H), lambda i: (i, 0, 0)),
        ),
        compiler_params=pltpu.CompilerParams(
            dimension_semantics=("parallel",),    # batch axis -> both TCs on v7x
        ),
    )(des, sta_2d, wd_t, ws_t, bias)


def _ref(des, sta, wd, bd, ws, bs):
    des_o = des @ wd.T + bd                                  # [B, H]
    sta_o = jnp.einsum("bsd,hd->bsh", sta, ws) + bs          # [B, S, H]
    return jnp.concatenate([des_o[:, None, :], sta_o], axis=1)


if __name__ == "__main__":
    B, S = 2, 8
    des_dim, sta_dim, hidden_dim = 24, 40, 32

    key = jax.random.PRNGKey(0)
    k_des, k_sta, k_wd, k_bd, k_ws, k_bs = jax.random.split(key, 6)

    des = jax.random.normal(k_des, (B, des_dim), dtype=jnp.float32)
    sta = jax.random.normal(k_sta, (B, S, sta_dim), dtype=jnp.float32)

    # deterministic synthetic parameters (nn.Linear layout: [out, in] weight, [out] bias)
    wd = jax.random.normal(k_wd, (hidden_dim, des_dim), dtype=jnp.float32) * 0.1
    bd = jax.random.normal(k_bd, (hidden_dim,), dtype=jnp.float32) * 0.1
    ws = jax.random.normal(k_ws, (hidden_dim, sta_dim), dtype=jnp.float32) * 0.1
    bs = jax.random.normal(k_bs, (hidden_dim,), dtype=jnp.float32) * 0.1

    out = jax.jit(text_encoding)(des, sta, wd, bd, ws, bs)
    out = jax.block_until_ready(out)

    expected = _ref(des, sta, wd, bd, ws, bs)
    assert out.shape == (B, S + 1, hidden_dim), out.shape
    assert jnp.allclose(out, expected, atol=1e-5, rtol=1e-5), float(
        jnp.max(jnp.abs(out - expected))
    )
    print("KERNEL_OK")
</pallas_src>

<mosaic_0001>
module attributes {stable_mosaic.version = 11 : i64} {
  func.func @text_encoding_kernel(%arg0: i32, %arg1: memref<2x24xf32, #tpu.memory_space<vmem>>, %arg2: memref<16x40xf32, #tpu.memory_space<vmem>>, %arg3: memref<24x32xf32, #tpu.memory_space<vmem>>, %arg4: memref<40x32xf32, #tpu.memory_space<vmem>>, %arg5: memref<9x32xf32, #tpu.memory_space<vmem>>, %arg6: memref<2x9x32xf32, #tpu.memory_space<vmem>>) attributes {dimension_semantics = [#tpu.dimension_semantics<parallel>], iteration_bounds = array<i64: 1>, scalar_prefetch = 0 : i64, scratch_operands = 0 : i64, tpu.core_type = #tpu.core_type<tc>, window_params = [{transform_indices = @transform_0, window_bounds = array<i64: 2, 24>}, {transform_indices = @transform_1, window_bounds = array<i64: 16, 40>}, {pipeline_mode = #tpu.pipeline_mode<synchronous>, transform_indices = @transform_2, window_bounds = array<i64: 24, 32>}, {pipeline_mode = #tpu.pipeline_mode<synchronous>, transform_indices = @transform_3, window_bounds = array<i64: 40, 32>}, {pipeline_mode = #tpu.pipeline_mode<synchronous>, transform_indices = @transform_4, window_bounds = array<i64: 9, 32>}, {transform_indices = @transform_5, window_bounds = array<i64: 2, 9, 32>}]} {
    %c0 = arith.constant 0 : index
    %c0_0 = arith.constant 0 : index
    %0 = vector.load %arg1[%c0, %c0_0] : memref<2x24xf32, #tpu.memory_space<vmem>>, vector<2x24xf32>
    %c0_1 = arith.constant 0 : index
    %c0_2 = arith.constant 0 : index
    %1 = vector.load %arg3[%c0_1, %c0_2] : memref<24x32xf32, #tpu.memory_space<vmem>>, vector<24x32xf32>
    %cst = arith.constant dense<0.000000e+00> : vector<2x32xf32>
    %2 = tpu.matmul %0, %1, %cst {dimension_numbers = #tpu.dot_dimension_numbers<[1], [0], [0], [1], [0, 0, 1, 1], [], []>} : vector<2x24xf32>, vector<24x32xf32>, vector<2x32xf32> -> vector<2x32xf32>
    %c0_3 = arith.constant 0 : index
    %c0_4 = arith.constant 0 : index
    %3 = vector.load %arg2[%c0_3, %c0_4] : memref<16x40xf32, #tpu.memory_space<vmem>>, vector<16x40xf32>
    %c0_5 = arith.constant 0 : index
    %c0_6 = arith.constant 0 : index
    %4 = vector.load %arg4[%c0_5, %c0_6] : memref<40x32xf32, #tpu.memory_space<vmem>>, vector<40x32xf32>
    %cst_7 = arith.constant dense<0.000000e+00> : vector<16x32xf32>
    %5 = tpu.matmul %3, %4, %cst_7 {dimension_numbers = #tpu.dot_dimension_numbers<[1], [0], [0], [1], [0, 0, 1, 1], [], []>} : vector<16x40xf32>, vector<40x32xf32>, vector<16x32xf32> -> vector<16x32xf32>
    %6 = vector.shape_cast %5 : vector<16x32xf32> to vector<2x8x32xf32>
    %7 = vector.shape_cast %2 : vector<2x32xf32> to vector<2x1x32xf32>
    %8 = tpu.concatenate %7, %6 in 1 : vector<2x1x32xf32>, vector<2x8x32xf32> -> vector<2x9x32xf32>
    %c0_8 = arith.constant 0 : index
    %c0_9 = arith.constant 0 : index
    %9 = vector.load %arg5[%c0_8, %c0_9] : memref<9x32xf32, #tpu.memory_space<vmem>>, vector<9x32xf32>
    %10 = vector.shape_cast %9 : vector<9x32xf32> to vector<1x9x32xf32>
    %11 = vector.broadcast %10 : vector<1x9x32xf32> to vector<2x9x32xf32>
    %12 = arith.addf %8, %11 : vector<2x9x32xf32>
    %c0_10 = arith.constant 0 : index
    %c0_11 = arith.constant 0 : index
    %c0_12 = arith.constant 0 : index
    %13 = vector.load %arg6[%c0_10, %c0_11, %c0_12] : memref<2x9x32xf32, #tpu.memory_space<vmem>>, vector<2x9x32xf32>
    tpu.vector_store %arg6[%c0_10, %c0_11, %c0_12], %12 {strides = array<i32>} : memref<2x9x32xf32, #tpu.memory_space<vmem>>, vector<2x9x32xf32>,
    return
  }
  func.func @transform_0(%arg0: i32) -> (i32, i32) {
    %c0_i32 = arith.constant 0 : i32
    %c0_i32_0 = arith.constant 0 : i32
    return %arg0, %c0_i32 : i32, i32
  }
  func.func @transform_1(%arg0: i32) -> (i32, i32) {
    %c0_i32 = arith.constant 0 : i32
    %c0_i32_0 = arith.constant 0 : i32
    return %arg0, %c0_i32 : i32, i32
  }
  func.func @transform_2(%arg0: i32) -> (i32, i32) {
    %c0_i32 = arith.constant 0 : i32
    %c0_i32_0 = arith.constant 0 : i32
    %c0_i32_1 = arith.constant 0 : i32
    return %c0_i32, %c0_i32_0 : i32, i32
  }
  func.func @transform_3(%arg0: i32) -> (i32, i32) {
    %c0_i32 = arith.constant 0 : i32
    %c0_i32_0 = arith.constant 0 : i32
    %c0_i32_1 = arith.constant 0 : i32
    return %c0_i32, %c0_i32_0 : i32, i32
  }
  func.func @transform_4(%arg0: i32) -> (i32, i32) {
    %c0_i32 = arith.constant 0 : i32
    %c0_i32_0 = arith.constant 0 : i32
    %c0_i32_1 = arith.constant 0 : i32
    return %c0_i32, %c0_i32_0 : i32, i32
  }
  func.func @transform_5(%arg0: i32) -> (i32, i32, i32) {
    %c0_i32 = arith.constant 0 : i32
    %c0_i32_0 = arith.constant 0 : i32
    %c0_i32_1 = arith.constant 0 : i32
    return %arg0, %c0_i32, %c0_i32_0 : i32, i32, i32
  }
}

</mosaic_0001>

<llo_original>
// kernel: text_encoding.1
$region0: #{text_encoding.1}
  #allocation0 [shape = 'u32[]', space=smem, size = 0x4, offset = 0x4, fixed_abs, tag = 'smem constant byte address 0x4 - core index']
  #allocation1 [shape = 'u32[144,128]{1,0:T(1,128)}', space=vmem, size = 0x12000, scoped, tag = 'internal scratch']
  %s0 = inlined_call_operand.vmem [shape: f32[2,24], index: 0, kind: input, shape index: {}]
  %s1 = inlined_call_operand.vmem [shape: f32[16,40], index: 1, kind: input, shape index: {}]
  %s2 = inlined_call_operand.vmem [shape: f32[24,32], index: 2, kind: input, shape index: {}]
  %s3 = inlined_call_operand.vmem [shape: f32[40,32], index: 3, kind: input, shape index: {}]
  %s4 = inlined_call_operand.vmem [shape: f32[9,32], index: 4, kind: input, shape index: {}]
  %s5 = inlined_call_operand.vmem [shape: f32[2,9,32], index: 5, kind: output, shape index: {}]
  %s6 = sld [smem:[#allocation0]]
  $region30: #{text_encoding.1} parent=0
    _
  %s8 = ssub.s32 1, %s6
  %s9 = scalar_select 0, %s8, %s6
  // Predicated region
  $region2: #{text_encoding.1} parent=0 // pred_check
    _
  $region3: #{text_encoding.1} parent=0 // pred_check_branch
    %11 = sbr.rel (0) target = $region5
  $region4: #{text_encoding.1} parent=0 // pred_region
    _
  $region5: #{text_encoding.1} parent=0 // pred_fallthru
    _
  // Predicated region
  $region6: #{text_encoding.1} parent=0 // pred_check
    _
  $region7: #{text_encoding.1} parent=0 // pred_check_branch
    %13 = sbr.rel (0) target = $region9
  $region8: #{text_encoding.1} parent=0 // pred_region
    _
  $region9: #{text_encoding.1} parent=0 // pred_fallthru
    _
  // Predicated region
  $region10: #{text_encoding.1} parent=0 // pred_check
    _
  $region11: #{text_encoding.1} parent=0 // pred_check_branch
    %15 = sbr.rel (0) target = $region13
  $region12: #{text_encoding.1} parent=0 // pred_region
    _
  $region13: #{text_encoding.1} parent=0 // pred_fallthru
    _
  // Predicated region
  $region14: #{text_encoding.1} parent=0 // pred_check
    _
  $region15: #{text_encoding.1} parent=0 // pred_check_branch
    %17 = sbr.rel (0) target = $region17
  $region16: #{text_encoding.1} parent=0 // pred_region
    _
  $region17: #{text_encoding.1} parent=0 // pred_fallthru
    _
  // Predicated region
  $region18: #{text_encoding.1} parent=0 // pred_check
    _
  $region19: #{text_encoding.1} parent=0 // pred_check_branch
    %19 = sbr.rel (0) target = $region21
  $region20: #{text_encoding.1} parent=0 // pred_region
    _
  $region21: #{text_encoding.1} parent=0 // pred_fallthru
    _
  %v20 = vld [vmem:[%s0] sm:$0x3]
  %v21 = vld [vmem:[%s2] sm:$0xff]
  %v22 = vld [vmem:[%s2 + $0x8] sm:$0xff]
  %v23 = vld [vmem:[%s2 + $0x10] sm:$0xff]
  %vm24 = vcmask 195584
  %v26 = vsel %vm24, %v20, 0
  %28 = vmatprep.subr.mxu0 0.0
  %29 = vmatpush1.msra.mxu0 %v21
  %30 = vmatprep.subr.mxu0 0.0
  %31 = vmatpush1.msra.mxu0 %v22
  %32 = vmatprep.subr.mxu0 0.0
  %33 = vmatpush1.msra.mxu0 %v23
  %34 = vmatprep.subr.mxu0 0.0
  %35 = vmatpush1.msra.mxu0 0.0
  %36 = vmatprep.subr.mxu0 0.0
  %37 = vmatpush1.msra.mxu0 0.0
  %38 = vmatprep.subr.mxu0 0.0
  %39 = vmatpush1.msra.mxu0 0.0
  %40 = vmatprep.subr.mxu0 0.0
  %41 = vmatpush1.msra.mxu0 0.0
  %42 = vmatprep.subr.mxu0 0.0
  %43 = vmatpush1.msra.mxu0 0.0
  %44 = vmatprep.subr.mxu0 0.0
  %45 = vmatpush1.msra.mxu0 0.0
  %46 = vmatprep.subr.mxu0 0.0
  %47 = vmatpush1.msra.mxu0 0.0
  %48 = vmatprep.subr.mxu0 0.0
  %49 = vmatpush1.msra.mxu0 0.0
  %50 = vmatprep.subr.mxu0 0.0
  %51 = vmatpush1.msra.mxu0 0.0
  %52 = vmatprep.subr.mxu0 0.0
  %53 = vmatpush1.msra.mxu0 0.0
  %54 = vmatprep.subr.mxu0 0.0
  %55 = vmatpush1.msra.mxu0 0.0
  %56 = vmatprep.subr.mxu0 0.0
  %57 = vmatpush1.msra.mxu0 0.0
  %58 = vmatprep.subr.mxu0 0.0
  %59 = vmatpush1.msra.mxu0 0.0
  %60 = vmatprep.subr.mxu0 0.0
  %61 = vmatpush1.msra.mxu0 0.0
  %62 = vmatprep.subr.mxu0 0.0
  %63 = vmatpush1.msra.mxu0 0.0
  %64 = vmatprep.subr.mxu0 0.0
  %65 = vmatpush1.msra.mxu0 0.0
  %66 = vmatprep.subr.mxu0 0.0
  %67 = vmatpush1.msra.mxu0 0.0
  %68 = vmatprep.subr.mxu0 0.0
  %69 = vmatpush1.msra.mxu0 0.0
  %70 = vmatprep.subr.mxu0 0.0
  %71 = vmatpush1.msra.mxu0 0.0
  %72 = vmatprep.subr.mxu0 0.0
  %73 = vmatpush1.msra.mxu0 0.0
  %74 = vmatprep.subr.mxu0 0.0
  %75 = vmatpush1.msra.mxu0 0.0
  %76 = vmatprep.subr.mxu0 0.0
  %77 = vmatpush1.msra.mxu0 0.0
  %78 = vmatprep.subr.mxu0 0.0
  %79 = vmatpush1.msra.mxu0 0.0
  %80 = vmatprep.subr.mxu0 0.0
  %81 = vmatpush1.msra.mxu0 0.0
  %82 = vmatprep.subr.mxu0 0.0
  %83 = vmatpush1.msra.mxu0 0.0
  %84 = vmatprep.subr.mxu0 0.0
  %85 = vmatpush1.msra.mxu0 0.0
  %86 = vmatprep.subr.mxu0 0.0
  %87 = vmatpush1.msra.mxu0 0.0
  %88 = vmatprep.subr.mxu0 0.0
  %89 = vmatpush1.msra.mxu0 0.0
  %90 = vmatprep.subr.mxu0 0.0
  %91 = vmatpush1.msra.mxu0 0.0
  %92 = vmatprep.mubr.f32.mxu0 0.0
  %93 = vmatmul.mubr.f32.gmra.mrb[0].mxu0 %v26
  %v94 = vpop.f32.mrb[0].mxu0
  %v95 = vadd.f32 0.0, %v94
  %v96 = vpop.f32.mrb[0].mxu0
  %97 = vdwg.mxu0
  %v98 = vld [vmem:[%s1] sm:$0xff]
  %v99 = vld [vmem:[%s1 + $0x8] sm:$0xff]
  %v100 = vld [vmem:[%s3] sm:$0xff]
  %v101 = vld [vmem:[%s3 + $0x8] sm:$0xff]
  %v102 = vld [vmem:[%s3 + $0x10] sm:$0xff]
  %v103 = vld [vmem:[%s3 + $0x18] sm:$0xff]
  %v104 = vld [vmem:[%s3 + $0x20] sm:$0xff]
  %vm105 = vcmask 326656
  %v107 = vsel %vm105, %v98, 0
  %v110 = vsel %vm105, %v99, 0
  %112 = vmatprep.subr.mxu0 0.0
  %113 = vmatpush1.msra.mxu0 %v100
  %114 = vmatprep.subr.mxu0 0.0
  %115 = vmatpush1.msra.mxu0 %v101
  %116 = vmatprep.subr.mxu0 0.0
  %117 = vmatpush1.msra.mxu0 %v102
  %118 = vmatprep.subr.mxu0 0.0
  %119 = vmatpush1.msra.mxu0 %v103
  %120 = vmatprep.subr.mxu0 0.0
  %121 = vmatpush1.msra.mxu0 %v104
  %122 = vmatprep.subr.mxu0 0.0
  %123 = vmatpush1.msra.mxu0 0.0
  %124 = vmatprep.subr.mxu0 0.0
  %125 = vmatpush1.msra.mxu0 0.0
  %126 = vmatprep.subr.mxu0 0.0
  %127 = vmatpush1.msra.mxu0 0.0
  %128 = vmatprep.subr.mxu0 0.0
  %129 = vmatpush1.msra.mxu0 0.0
  %130 = vmatprep.subr.mxu0 0.0
  %131 = vmatpush1.msra.mxu0 0.0
  %132 = vmatprep.subr.mxu0 0.0
  %133 = vmatpush1.msra.mxu0 0.0
  %134 = vmatprep.subr.mxu0 0.0
  %135 = vmatpush1.msra.mxu0 0.0
  %136 = vmatprep.subr.mxu0 0.0
  %137 = vmatpush1.msra.mxu0 0.0
  %138 = vmatprep.subr.mxu0 0.0
  %139 = vmatpush1.msra.mxu0 0.0
  %140 = vmatprep.subr.mxu0 0.0
  %141 = vmatpush1.msra.mxu0 0.0
  %142 = vmatprep.subr.mxu0 0.0
  %143 = vmatpush1.msra.mxu0 0.0
  %144 = vmatprep.subr.mxu0 0.0
  %145 = vmatpush1.msra.mxu0 0.0
  %146 = vmatprep.subr.mxu0 0.0
  %147 = vmatpush1.msra.mxu0 0.0
  %148 = vmatprep.subr.mxu0 0.0
  %149 = vmatpush1.msra.mxu0 0.0
  %150 = vmatprep.subr.mxu0 0.0
  %151 = vmatpush1.msra.mxu0 0.0
  %152 = vmatprep.subr.mxu0 0.0
  %153 = vmatpush1.msra.mxu0 0.0
  %154 = vmatprep.subr.mxu0 0.0
  %155 = vmatpush1.msra.mxu0 0.0
  %156 = vmatprep.subr.mxu0 0.0
  %157 = vmatpush1.msra.mxu0 0.0
  %158 = vmatprep.subr.mxu0 0.0
  %159 = vmatpush1.msra.mxu0 0.0
  %160 = vmatprep.subr.mxu0 0.0
  %161 = vmatpush1.msra.mxu0 0.0
  %162 = vmatprep.subr.mxu0 0.0
  %163 = vmatpush1.msra.mxu0 0.0
  %164 = vmatprep.subr.mxu0 0.0
  %165 = vmatpush1.msra.mxu0 0.0
  %166 = vmatprep.subr.mxu0 0.0
  %167 = vmatpush1.msra.mxu0 0.0
  %168 = vmatprep.subr.mxu0 0.0
  %169 = vmatpush1.msra.mxu0 0.0
  %170 = vmatprep.subr.mxu0 0.0
  %171 = vmatpush1.msra.mxu0 0.0
  %172 = vmatprep.subr.mxu0 0.0
  %173 = vmatpush1.msra.mxu0 0.0
  %174 = vmatprep.subr.mxu0 0.0
  %175 = vmatpush1.msra.mxu0 0.0
  %176 = vmatprep.mubr.f32.mxu0 0.0
  %177 = vmatmul.mubr.f32.gmra.mrb[0].mxu0 %v107
  %v178 = vpop.f32.mrb[0].mxu0
  %v179 = vadd.f32 0.0, %v178
  %v180 = vpop.f32.mrb[0].mxu0
  %181 = vmatprep.mubr.f32.mxu0 0.0
  %182 = vmatmul.mubr.f32.gmra.mrb[0].mxu0 %v110
  %v183 = vpop.f32.mrb[0].mxu0
  %v184 = vadd.f32 0.0, %v183
  %v185 = vpop.f32.mrb[0].mxu0
  %186 = vdwg.mxu0
  %v189 = vunpack.c.l.s4 1966171168
  %v190 = vunpack.c.0.s8 %v189
  %v191 = vlaneseq
  %v192 = vshrl.u32 %v191, 7
  %v193 = vsub.s32 %v190, %v192
  %v194 = vrot.slane %v95, %v193
  %v195 = vcombine.high %v194, %v194
  %v197 = vunpack.c.l.s4 1966171168
  %v198 = vunpack.c.0.s8 %v197
  %v199 = vlaneseq
  %v200 = vshrl.u32 %v199, 7
  %v201 = vsub.s32 %v198, %v200
  %v202 = vrot.slane %v194, %v201
  %v204 = vunpack.c.l.s4 1966171168
  %v205 = vunpack.c.0.s8 %v204
  %v206 = vlaneseq
  %v207 = vshrl.u32 %v206, 7
  %v208 = vsub.s32 %v205, %v207
  %v209 = vrot.slane %v195, %v208
  %v214 = vrot.slane %v179, 7
  %v215 = vrot.slane %v184, 7
  %vm218 = vcmask 1040384
  %v219 = vsel %vm218, %v202, %v214
  %v220 = vsel %vm218, %v209, %v215
  %v221 = vld [vmem:[%s4] sm:$0xff]
  %v222 = vld [vmem:[%s4 + $0x8] sm:$0x1]
  %v223 = vadd.f32 %v219, %v221
  %v224 = vadd.f32 %v214, %v222
  %v225 = vadd.f32 %v220, %v221
  %v226 = vadd.f32 %v215, %v222
  %vm227 = vcmask 261120
  %228 = vst.msk [vmem:[%s5] sm:$0xff] %vm227, %v223
  %vm229 = vcmask 253952
  %230 = vst.msk [vmem:[%s5 + $0x8] sm:$0x1] %vm229, %v224
  %231 = vst.msk [vmem:[%s5 + $0x10] sm:$0xff] %vm227, %v225
  %232 = vst.msk [vmem:[%s5 + $0x18] sm:$0x1] %vm229, %v226
  // Predicated region
  $region22: #{text_encoding.1} parent=0 // pred_check
    _
  $region23: #{text_encoding.1} parent=0 // pred_check_branch
    %234 = sbr.rel (0) target = $region25
  $region24: #{text_encoding.1} parent=0 // pred_region
    _
  $region25: #{text_encoding.1} parent=0 // pred_fallthru
    _
  // Predicated region
  $region26: #{text_encoding.1} parent=0 // pred_check
    _
  $region27: #{text_encoding.1} parent=0 // pred_check_branch
    %236 = sbr.rel (0) target = $region29
  $region28: #{text_encoding.1} parent=0 // pred_region
    _
  $region29: #{text_encoding.1} parent=0 // pred_fallthru
    _

</llo_original>
